<compile_context>
chip_gen: v7x
topology: tpu7x:2x2x1
jax: 0.10.0
libtpu: 0.0.40
codegen_flags: <defaults>
</compile_context>

<pallas_src>
import functools

import jax
import jax.numpy as jnp
from jax.experimental import pallas as pl
from jax.experimental.pallas import tpu as pltpu

_LANE = 128
_SQRT_2PI = (2.0 * 3.14159) ** 0.5       # matches the torch.jit.script constant


def _gaussian_kernel(val_ref, p_ref, o_ref, *, exp_in_bf16):
    # val_ref: (TM, 1)   p_ref: (3, Kp) = [mean; c=-0.5/std^2; coef]   o_ref: (TM, Kp)
    val = val_ref[...]                    # (TM, 1)
    mean = p_ref[0:1, :]                  # (1, Kp)
    c = p_ref[1:2, :]                     # (1, Kp) == -0.5 / std^2
    coef = p_ref[2:3, :]                  # (1, Kp) == 1 / (sqrt(2*pi) * std)
    d = val - mean                        # broadcast -> (TM, Kp)
    z = d * d * c                         # == -0.5 * ((v - mean)/std)^2
    if exp_in_bf16:
        # Opt-in (v6e/v7x only): bf16 EUP doubles exp throughput; ~1e-3 rel. error.
        e = jnp.exp(z.astype(jnp.bfloat16)).astype(jnp.float32)
    else:
        e = jnp.exp(z)
    o_ref[...] = (e * coef).astype(o_ref.dtype)


def _round_up(n, m):
    return ((n + m - 1) // m) * m


def _tpu_vmem_and_cores():
    """Best-effort query: (physical VMEM bytes per core, TensorCores per chip)."""
    vmem = None
    try:
        vmem = getattr(pltpu.get_tpu_info(), "vmem_capacity_bytes", None)
    except Exception:
        vmem = None
    kind = ""
    try:
        kind = jax.devices()[0].device_kind.lower()
    except Exception:
        pass
    cores = 2 if ("v7" in kind or "7x" in kind) else 1   # v5e/v6e: 1 TC per chip
    if vmem is None:
        vmem = (64 << 20) if cores == 2 else (128 << 20)
    return int(vmem), cores


def _choose_grid(M, tm_max, num_cores):
    """Pick (row tile, grid steps): tile a multiple of 8, steps*tile >= M, and a
    core-balanced step count on multi-TC chips (v7x). Single-TC chips keep the
    biggest single-step tile for small M (no forced split)."""
    tm_max = max(8, (tm_max // 8) * 8)
    M8 = _round_up(max(M, 1), 8)
    if M8 <= tm_max:
        if num_cores > 1 and M8 >= 16 * num_cores:
            steps = num_cores
            tm = _round_up(-(-M8 // steps), 8)
        else:
            steps, tm = 1, M8
    else:
        steps = -(-M8 // tm_max)
        if steps % num_cores:
            steps += num_cores - steps % num_cores
        tm = _round_up(-(-M8 // steps), 8)
        steps = -(-M8 // tm)
        if num_cores > 1 and steps > 1 and steps % num_cores:
            steps += num_cores - steps % num_cores
    return tm, steps


def gaussian_layer_pallas(x, edge_type, means_w, stds_w, mul_w, bias_w, *,
                          tm=8192, exp_in_bf16=False, out_dtype=jnp.float32):
    """x: (B, N, N) float, edge_type: (B, N, N) int. Returns (B, N, N, K)."""
    B, N1, N2 = x.shape
    K = means_w.shape[-1]
    M = B * N1 * N2
    Kp = _round_up(K, _LANE)              # lane-dense output -> unmasked vst path

    # --- VMEM-aware tile / grid choice ---------------------------------------
    vmem_cap, num_cores = _tpu_vmem_and_cores()
    # Double-buffered output tile + double-buffered (tm, 1) val tile.  The val
    # tile is lane-padded to 128 lanes in VMEM: tm * 512 B per buffer, NOT tm*4.
    bytes_per_row = 2 * Kp * 4 + 2 * _LANE * 4
    budget = min(vmem_cap // 2, 48 << 20)
    tm_cap = max(8, ((budget // bytes_per_row) // 8) * 8)
    tm_eff, steps = _choose_grid(M, min(tm, tm_cap), num_cores)
    Mp = tm_eff * steps

    # --- glue: pad BEFORE the gather so gather + FMA + pad fuse into one pass --
    x_flat = x.reshape(-1)
    et_flat = edge_type.reshape(-1)
    if Mp > M:
        x_flat = jnp.pad(x_flat, (0, Mp - M))
        et_flat = jnp.pad(et_flat, (0, Mp - M))       # index 0 is always valid
    mul = jnp.take(mul_w[:, 0], et_flat).astype(x_flat.dtype)
    bias = jnp.take(bias_w[:, 0], et_flat).astype(x_flat.dtype)
    val_col = (mul * x_flat + bias).astype(jnp.float32).reshape(Mp, 1)

    # --- per-k constants: divides AND the -0.5 hoisted out of the kernel -------
    mean = means_w.reshape(-1).astype(jnp.float32)
    std = jnp.abs(stds_w.reshape(-1)).astype(jnp.float32) + 1e-5
    inv_std = 1.0 / std
    c = -0.5 * inv_std * inv_std
    coef = inv_std / _SQRT_2PI
    params = jnp.stack([mean, c, coef], axis=0)        # (3, K)
    if Kp > K:
        # Padded columns: mean=0, c=0, coef=0  ->  exp(0) * 0 = 0, sliced off below.
        params = jnp.pad(params, ((0, 0), (0, Kp - K)))

    # --- scheduling hints -------------------------------------------------------
    cost = pl.CostEstimate(
        flops=4 * M * K,                    # sub + 3 muls per output element
        transcendentals=M * K,              # one exp per output element
        bytes_accessed=4 * Mp * Kp + 4 * Mp + steps * 3 * 4 * Kp)

    vmem_bytes = tm_eff * bytes_per_row + 2 * 8 * Kp * 4 + (1 << 20)
    cp_kwargs = dict(dimension_semantics=("parallel",))
    if vmem_bytes > (14 << 20):             # v5e default scoped limit is ~16 MiB
        cp_kwargs["vmem_limit_bytes"] = int(min(vmem_bytes + (4 << 20),
                                                (vmem_cap * 3) // 4))

    out = pl.pallas_call(
        functools.partial(_gaussian_kernel, exp_in_bf16=exp_in_bf16),
        out_shape=jax.ShapeDtypeStruct((Mp, Kp), out_dtype),
        grid_spec=pltpu.PrefetchScalarGridSpec(
            num_scalar_prefetch=0,
            grid=(steps,),
            in_specs=[
                pl.BlockSpec((tm_eff, 1), lambda i: (i, 0)),   # fused val column
                pl.BlockSpec((3, Kp), lambda i: (0, 0)),       # mean / c / coef
            ],
            out_specs=pl.BlockSpec((tm_eff, Kp), lambda i: (i, 0)),
        ),
        compiler_params=pltpu.CompilerParams(**cp_kwargs),
        cost_estimate=cost,
    )(val_col, params)

    return out[:M, :K].reshape(B, N1, N2, K)


def gaussian_layer_ref(x, edge_type, means_w, stds_w, mul_w, bias_w):
    """Pure-JAX reference mirroring the PyTorch forward."""
    K = means_w.shape[-1]
    mul = mul_w[edge_type].astype(x.dtype)          # (B,N,N,1)
    bias = bias_w[edge_type].astype(x.dtype)        # (B,N,N,1)
    v = mul * x[..., None] + bias                   # (B,N,N,1)
    v = jnp.broadcast_to(v, v.shape[:-1] + (K,)).astype(jnp.float32)
    mean = means_w.reshape(-1).astype(jnp.float32)
    std = jnp.abs(stds_w.reshape(-1)).astype(jnp.float32) + 1e-5
    return (jnp.exp(-0.5 * ((v - mean) / std) ** 2) / (_SQRT_2PI * std)).astype(jnp.float32)


if __name__ == "__main__":
    K = 128
    edge_types = 1024
    B, N = 2, 8

    key = jax.random.PRNGKey(0)
    k1, k2, k3, k4 = jax.random.split(key, 4)

    # Deterministic parameter init mirroring the module __init__:
    means_w = jax.random.uniform(k1, (1, K), jnp.float32, 0.0, 1.0)   # Embedding(1, K)
    stds_w = jax.random.uniform(k2, (1, K), jnp.float32, 0.0, 1.0)    # Embedding(1, K)
    mul_w = jnp.full((edge_types, 1), 0.5, jnp.float32)               # Embedding(E, 1) = 0.5
    bias_w = jnp.zeros((edge_types, 1), jnp.float32)                  # Embedding(E, 1) = 0

    x = jax.random.normal(k3, (B, N, N), jnp.float32) * 3.0
    edge_type = jax.random.randint(k4, (B, N, N), 0, edge_types, jnp.int32)

    out = gaussian_layer_pallas(x, edge_type, means_w, stds_w, mul_w, bias_w)
    out = jax.block_until_ready(out)

    ref = gaussian_layer_ref(x, edge_type, means_w, stds_w, mul_w, bias_w)
    assert out.shape == (B, N, N, K), out.shape
    assert out.dtype == jnp.float32
    assert jnp.allclose(out, ref, atol=1e-5, rtol=1e-5), float(jnp.max(jnp.abs(out - ref)))

    print("KERNEL_OK")
</pallas_src>

<mosaic_0001>
module attributes {stable_mosaic.version = 11 : i64} {
  func.func @_gaussian_kernel(%arg0: i32, %arg1: memref<128x1xf32, #tpu.memory_space<vmem>>, %arg2: memref<3x128xf32, #tpu.memory_space<vmem>>, %arg3: memref<128x128xf32, #tpu.memory_space<vmem>>) attributes {dimension_semantics = [#tpu.dimension_semantics<parallel>], iteration_bounds = array<i64: 1>, scalar_prefetch = 0 : i64, scratch_operands = 0 : i64, tpu.core_type = #tpu.core_type<tc>, window_params = [{transform_indices = @transform_0, window_bounds = array<i64: 128, 1>}, {pipeline_mode = #tpu.pipeline_mode<synchronous>, transform_indices = @transform_1, window_bounds = array<i64: 3, 128>}, {transform_indices = @transform_2, window_bounds = array<i64: 128, 128>}]} {
    %c0 = arith.constant 0 : index
    %c0_0 = arith.constant 0 : index
    %0 = vector.load %arg1[%c0, %c0_0] : memref<128x1xf32, #tpu.memory_space<vmem>>, vector<128x1xf32>
    %c0_1 = arith.constant 0 : index
    %c0_2 = arith.constant 0 : index
    %1 = vector.load %arg2[%c0_1, %c0_2] : memref<3x128xf32, #tpu.memory_space<vmem>>, vector<1x128xf32>
    %c1 = arith.constant 1 : index
    %c0_3 = arith.constant 0 : index
    %2 = vector.load %arg2[%c1, %c0_3] : memref<3x128xf32, #tpu.memory_space<vmem>>, vector<1x128xf32>
    %c2 = arith.constant 2 : index
    %c0_4 = arith.constant 0 : index
    %3 = vector.load %arg2[%c2, %c0_4] : memref<3x128xf32, #tpu.memory_space<vmem>>, vector<1x128xf32>
    %4 = vector.broadcast %0 : vector<128x1xf32> to vector<128x128xf32>
    %5 = vector.broadcast %1 : vector<1x128xf32> to vector<128x128xf32>
    %6 = arith.subf %4, %5 : vector<128x128xf32>
    %7 = arith.mulf %6, %6 : vector<128x128xf32>
    %8 = vector.broadcast %2 : vector<1x128xf32> to vector<128x128xf32>
    %9 = arith.mulf %7, %8 : vector<128x128xf32>
    %10 = math.exp %9 : vector<128x128xf32>
    %11 = vector.broadcast %3 : vector<1x128xf32> to vector<128x128xf32>
    %12 = arith.mulf %10, %11 : vector<128x128xf32>
    %c0_5 = arith.constant 0 : index
    %c0_6 = arith.constant 0 : index
    %13 = vector.load %arg3[%c0_5, %c0_6] : memref<128x128xf32, #tpu.memory_space<vmem>>, vector<128x128xf32>
    tpu.vector_store %arg3[%c0_5, %c0_6], %12 {strides = array<i32>} : memref<128x128xf32, #tpu.memory_space<vmem>>, vector<128x128xf32>,
    return
  }
  func.func @transform_0(%arg0: i32) -> (i32, i32) {
    %c0_i32 = arith.constant 0 : i32
    %c0_i32_0 = arith.constant 0 : i32
    return %arg0, %c0_i32 : i32, i32
  }
  func.func @transform_1(%arg0: i32) -> (i32, i32) {
    %c0_i32 = arith.constant 0 : i32
    %c0_i32_0 = arith.constant 0 : i32
    %c0_i32_1 = arith.constant 0 : i32
    return %c0_i32, %c0_i32_0 : i32, i32
  }
  func.func @transform_2(%arg0: i32) -> (i32, i32) {
    %c0_i32 = arith.constant 0 : i32
    %c0_i32_0 = arith.constant 0 : i32
    return %arg0, %c0_i32 : i32, i32
  }
}

</mosaic_0001>

<llo_original>
// kernel: tpu_custom_call.1
$region0: #{tpu_custom_call.1}
  #allocation0 [shape = 'u32[]', space=smem, size = 0x4, offset = 0x4, fixed_abs, tag = 'smem constant byte address 0x4 - core index']
  #allocation1 [shape = 'u32[144,128]{1,0:T(1,128)}', space=vmem, size = 0x12000, scoped, tag = 'internal scratch']
  %s0 = inlined_call_operand.vmem [shape: f32[128,1], index: 0, kind: input, shape index: {}]
  %s1 = inlined_call_operand.vmem [shape: f32[3,128], index: 1, kind: input, shape index: {}]
  %s2 = inlined_call_operand.hbm [shape: f32[128,128], index: 2, kind: output, shape index: {}]
  %s3 = sld [smem:[#allocation0]]
  $region18: #{tpu_custom_call.1} parent=0
    _
  %s5 = ssub.s32 1, %s3
  %s6 = scalar_select 0, %s5, %s3
  $region1: #{tpu_custom_call.1} parent=0
    #allocation2 [shape = 'u8[65536]{0}', space=vmem, size = 0x10000, scoped, tag = 'output window, operand 0, single buffered']
    #allocation3 [shape = 's32[1]{0}', space=sflag, size = 0x4, scoped, tag = 'scoped memory for tpu_custom_call.1']
    %7 = vsyncpa [#allocation3], 0
    // Predicated region
    $region2: #{tpu_custom_call.1} parent=1 // pred_check
      _
    $region3: #{tpu_custom_call.1} parent=1 // pred_check_branch
      %9 = sbr.rel (0) target = $region5
    $region4: #{tpu_custom_call.1} parent=1 // pred_region
      _
    $region5: #{tpu_custom_call.1} parent=1 // pred_fallthru
      _
    // Predicated region
    $region6: #{tpu_custom_call.1} parent=1 // pred_check
      _
    $region7: #{tpu_custom_call.1} parent=1 // pred_check_branch
      %11 = sbr.rel (0) target = $region9
    $region8: #{tpu_custom_call.1} parent=1 // pred_region
      _
    $region9: #{tpu_custom_call.1} parent=1 // pred_fallthru
      _
    %v12 = vld [vmem:[%s0] sm:$0xff]
    %v13 = vld [vmem:[%s0 + $0x8] sm:$0xff]
    %v14 = vld [vmem:[%s0 + $0x10] sm:$0xff]
    %v15 = vld [vmem:[%s0 + $0x18] sm:$0xff]
    %v16 = vld [vmem:[%s0 + $0x20] sm:$0xff]
    %v17 = vld [vmem:[%s0 + $0x28] sm:$0xff]
    %v18 = vld [vmem:[%s0 + $0x30] sm:$0xff]
    %v19 = vld [vmem:[%s0 + $0x38] sm:$0xff]
    %v20 = vld [vmem:[%s0 + $0x40] sm:$0xff]
    %v21 = vld [vmem:[%s0 + $0x48] sm:$0xff]
    %v22 = vld [vmem:[%s0 + $0x50] sm:$0xff]
    %v23 = vld [vmem:[%s0 + $0x58] sm:$0xff]
    %v24 = vld [vmem:[%s0 + $0x60] sm:$0xff]
    %v25 = vld [vmem:[%s0 + $0x68] sm:$0xff]
    %v26 = vld [vmem:[%s0 + $0x70] sm:$0xff]
    %v27 = vld [vmem:[%s0 + $0x78] sm:$0xff]
    %v28 = vld [vmem:[%s1] sm:$0x1]
    %v29 = vld [vmem:[%s1 + $0x1] sm:$0x1]
    %v30 = vld [vmem:[%s1 + $0x2] sm:$0x1]
    %32 = vset.pattern.permute.xlu0 0
    %33 = vperm.xlu0 %32, %v12
    %v34 = vpop.permute.xlu0 %33
    %37 = vset.pattern.permute.xlu0 0
    %38 = vperm.xlu0 %37, %v13
    %v39 = vpop.permute.xlu0 %38
    %42 = vset.pattern.permute.xlu0 0
    %43 = vperm.xlu0 %42, %v14
    %v44 = vpop.permute.xlu0 %43
    %47 = vset.pattern.permute.xlu0 0
    %48 = vperm.xlu0 %47, %v15
    %v49 = vpop.permute.xlu0 %48
    %52 = vset.pattern.permute.xlu0 0
    %53 = vperm.xlu0 %52, %v16
    %v54 = vpop.permute.xlu0 %53
    %57 = vset.pattern.permute.xlu0 0
    %58 = vperm.xlu0 %57, %v17
    %v59 = vpop.permute.xlu0 %58
    %62 = vset.pattern.permute.xlu0 0
    %63 = vperm.xlu0 %62, %v18
    %v64 = vpop.permute.xlu0 %63
    %67 = vset.pattern.permute.xlu0 0
    %68 = vperm.xlu0 %67, %v19
    %v69 = vpop.permute.xlu0 %68
    %72 = vset.pattern.permute.xlu0 0
    %73 = vperm.xlu0 %72, %v20
    %v74 = vpop.permute.xlu0 %73
    %77 = vset.pattern.permute.xlu0 0
    %78 = vperm.xlu0 %77, %v21
    %v79 = vpop.permute.xlu0 %78
    %82 = vset.pattern.permute.xlu0 0
    %83 = vperm.xlu0 %82, %v22
    %v84 = vpop.permute.xlu0 %83
    %87 = vset.pattern.permute.xlu0 0
    %88 = vperm.xlu0 %87, %v23
    %v89 = vpop.permute.xlu0 %88
    %92 = vset.pattern.permute.xlu0 0
    %93 = vperm.xlu0 %92, %v24
    %v94 = vpop.permute.xlu0 %93
    %97 = vset.pattern.permute.xlu0 0
    %98 = vperm.xlu0 %97, %v25
    %v99 = vpop.permute.xlu0 %98
    %102 = vset.pattern.permute.xlu0 0
    %103 = vperm.xlu0 %102, %v26
    %v104 = vpop.permute.xlu0 %103
    %107 = vset.pattern.permute.xlu0 0
    %108 = vperm.xlu0 %107, %v27
    %v109 = vpop.permute.xlu0 %108
    %v111 = vlaneseq
    %v112 = vshrl.u32 %v111, 7
    %v113 = vsub.s32 0, %v112
    %v114 = vrot.slane %v28, %v113
    %v115 = vsub.f32 %v34, %v114
    %v116 = vsub.f32 %v39, %v114
    %v117 = vsub.f32 %v44, %v114
    %v118 = vsub.f32 %v49, %v114
    %v119 = vsub.f32 %v54, %v114
    %v120 = vsub.f32 %v59, %v114
    %v121 = vsub.f32 %v64, %v114
    %v122 = vsub.f32 %v69, %v114
    %v123 = vsub.f32 %v74, %v114
    %v124 = vsub.f32 %v79, %v114
    %v125 = vsub.f32 %v84, %v114
    %v126 = vsub.f32 %v89, %v114
    %v127 = vsub.f32 %v94, %v114
    %v128 = vsub.f32 %v99, %v114
    %v129 = vsub.f32 %v104, %v114
    %v130 = vsub.f32 %v109, %v114
    %v131 = vmul.f32 %v115, %v115
    %v132 = vmul.f32 %v116, %v116
    %v133 = vmul.f32 %v117, %v117
    %v134 = vmul.f32 %v118, %v118
    %v135 = vmul.f32 %v119, %v119
    %v136 = vmul.f32 %v120, %v120
    %v137 = vmul.f32 %v121, %v121
    %v138 = vmul.f32 %v122, %v122
    %v139 = vmul.f32 %v123, %v123
    %v140 = vmul.f32 %v124, %v124
    %v141 = vmul.f32 %v125, %v125
    %v142 = vmul.f32 %v126, %v126
    %v143 = vmul.f32 %v127, %v127
    %v144 = vmul.f32 %v128, %v128
    %v145 = vmul.f32 %v129, %v129
    %v146 = vmul.f32 %v130, %v130
    %v147 = vlaneseq
    %v148 = vshrl.u32 %v147, 7
    %v149 = vsub.s32 0, %v148
    %v150 = vrot.slane %v29, %v149
    %v151 = vmul.f32 %v131, %v150
    %v152 = vmul.f32 %v132, %v150
    %v153 = vmul.f32 %v133, %v150
    %v154 = vmul.f32 %v134, %v150
    %v155 = vmul.f32 %v135, %v150
    %v156 = vmul.f32 %v136, %v150
    %v157 = vmul.f32 %v137, %v150
    %v158 = vmul.f32 %v138, %v150
    %v159 = vmul.f32 %v139, %v150
    %v160 = vmul.f32 %v140, %v150
    %v161 = vmul.f32 %v141, %v150
    %v162 = vmul.f32 %v142, %v150
    %v163 = vmul.f32 %v143, %v150
    %v164 = vmul.f32 %v144, %v150
    %v165 = vmul.f32 %v145, %v150
    %v166 = vmul.f32 %v146, %v150
    %v167 = vmul.f32 %v151, 1.442695
    %v168 = vpow.pop %v167
    %v169 = vmul.f32 %v152, 1.442695
    %v170 = vpow.pop %v169
    %v171 = vmul.f32 %v153, 1.442695
    %v172 = vpow.pop %v171
    %v173 = vmul.f32 %v154, 1.442695
    %v174 = vpow.pop %v173
    %v175 = vmul.f32 %v155, 1.442695
    %v176 = vpow.pop %v175
    %v177 = vmul.f32 %v156, 1.442695
    %v178 = vpow.pop %v177
    %v179 = vmul.f32 %v157, 1.442695
    %v180 = vpow.pop %v179
    %v181 = vmul.f32 %v158, 1.442695
    %v182 = vpow.pop %v181
    %v183 = vmul.f32 %v159, 1.442695
    %v184 = vpow.pop %v183
    %v185 = vmul.f32 %v160, 1.442695
    %v186 = vpow.pop %v185
    %v187 = vmul.f32 %v161, 1.442695
    %v188 = vpow.pop %v187
    %v189 = vmul.f32 %v162, 1.442695
    %v190 = vpow.pop %v189
    %v191 = vmul.f32 %v163, 1.442695
    %v192 = vpow.pop %v191
    %v193 = vmul.f32 %v164, 1.442695
    %v194 = vpow.pop %v193
    %v195 = vmul.f32 %v165, 1.442695
    %v196 = vpow.pop %v195
    %v197 = vmul.f32 %v166, 1.442695
    %v198 = vpow.pop %v197
    %v199 = vlaneseq
    %v200 = vshrl.u32 %v199, 7
    %v201 = vsub.s32 0, %v200
    %v202 = vrot.slane %v30, %v201
    %v203 = vmul.f32 %v168, %v202
    %v204 = vmul.f32 %v170, %v202
    %v205 = vmul.f32 %v172, %v202
    %v206 = vmul.f32 %v174, %v202
    %v207 = vmul.f32 %v176, %v202
    %v208 = vmul.f32 %v178, %v202
    %v209 = vmul.f32 %v180, %v202
    %v210 = vmul.f32 %v182, %v202
    %v211 = vmul.f32 %v184, %v202
    %v212 = vmul.f32 %v186, %v202
    %v213 = vmul.f32 %v188, %v202
    %v214 = vmul.f32 %v190, %v202
    %v215 = vmul.f32 %v192, %v202
    %v216 = vmul.f32 %v194, %v202
    %v217 = vmul.f32 %v196, %v202
    %v218 = vmul.f32 %v198, %v202
    %219 = vst [vmem:[#allocation2] sm:$0xff] %v203
    %220 = vst [vmem:[#allocation2 + $0x8] sm:$0xff] %v204
    %221 = vst [vmem:[#allocation2 + $0x10] sm:$0xff] %v205
    %222 = vst [vmem:[#allocation2 + $0x18] sm:$0xff] %v206
    %223 = vst [vmem:[#allocation2 + $0x20] sm:$0xff] %v207
    %224 = vst [vmem:[#allocation2 + $0x28] sm:$0xff] %v208
    %225 = vst [vmem:[#allocation2 + $0x30] sm:$0xff] %v209
    %226 = vst [vmem:[#allocation2 + $0x38] sm:$0xff] %v210
    %227 = vst [vmem:[#allocation2 + $0x40] sm:$0xff] %v211
    %228 = vst [vmem:[#allocation2 + $0x48] sm:$0xff] %v212
    %229 = vst [vmem:[#allocation2 + $0x50] sm:$0xff] %v213
    %230 = vst [vmem:[#allocation2 + $0x58] sm:$0xff] %v214
    %231 = vst [vmem:[#allocation2 + $0x60] sm:$0xff] %v215
    %232 = vst [vmem:[#allocation2 + $0x68] sm:$0xff] %v216
    %233 = vst [vmem:[#allocation2 + $0x70] sm:$0xff] %v217
    %234 = vst [vmem:[#allocation2 + $0x78] sm:$0xff] %v218
    // Predicated region
    $region10: #{tpu_custom_call.1} parent=1 // pred_check
      _
    $region11: #{tpu_custom_call.1} parent=1 // pred_check_branch
      %236 = sbr.rel (0) target = $region13
    $region12: #{tpu_custom_call.1} parent=1 // pred_region
      %s238 = ssub.s32 2048, 2048
      %239 = vsyncadd [#allocation3], %s238
      %s240 = sshll.u32 [#allocation2], 4
      %s241 = int_to_ptr.vmem [resolvable:$true] %s240
      %246 = dma.vmem_to_hbm [thread:$0]  %s241, 2048, %s2, [#allocation3], 128, 128, 8
    $region13: #{tpu_custom_call.1} parent=1 // pred_fallthru
      _
    // Predicated region
    $region14: #{tpu_custom_call.1} parent=1 // pred_check
      _
    $region15: #{tpu_custom_call.1} parent=1 // pred_check_branch
      %248 = sbr.rel (0) target = $region17
    $region16: #{tpu_custom_call.1} parent=1 // pred_region
      %249 = dma.done [#allocation3], 2048
    $region17: #{tpu_custom_call.1} parent=1 // pred_fallthru
      _
    %250 = vsyncpa [#allocation3], 1

</llo_original>
